<compile_context>
chip_gen: v5e
topology: v5e:2x2
jax: 0.10.0
libtpu: 0.0.40
codegen_flags: <defaults>
</compile_context>

<pallas_src>
import math

import jax
import jax.numpy as jnp
from jax.experimental import pallas as pl
from jax.experimental.pallas import tpu as pltpu


def make_pos_embedding(hidden_dim: int, maxlen: int = 5000) -> jnp.ndarray:
    """Sinusoidal table identical to the PyTorch __init__, shape (1, maxlen, H)."""
    den = jnp.exp(-jnp.arange(0, hidden_dim, 2, dtype=jnp.float32)
                  * (math.log(10000.0) / hidden_dim))            # (H/2,)
    pos = jnp.arange(0, maxlen, dtype=jnp.float32)[:, None]      # (maxlen, 1)
    pe = jnp.zeros((maxlen, hidden_dim), dtype=jnp.float32)
    pe = pe.at[:, 0::2].set(jnp.sin(pos * den))
    pe = pe.at[:, 1::2].set(jnp.cos(pos * den))
    return pe[None, :, :]                                        # (1, maxlen, H)


# --------------------------------------------------------------------------
# Kernels
# --------------------------------------------------------------------------
def _pe_add_kernel(x_ref, pe_ref, o_ref):
    # eval mode: dropout is identity; pe broadcasts over the batch axis.
    o_ref[...] = (x_ref[...] + pe_ref[...]).astype(o_ref.dtype)


def _pe_add_dropout_kernel(x_ref, pe_ref, mask_ref, o_ref):
    # mask is pre-scaled:  keep / (1 - p_drop)  or  0.0
    y = (x_ref[...] + pe_ref[...]) * mask_ref[...]
    o_ref[...] = y.astype(o_ref.dtype)


# --------------------------------------------------------------------------
# Wrapper
# --------------------------------------------------------------------------
_BLOCK_BUDGET_BYTES = 3 * 1024 * 1024   # per x/out/mask block; keeps total VMEM
                                        # (double-buffered) far below the scoped limit


def positional_encoding(x: jnp.ndarray,
                        pos_embedding: jnp.ndarray,
                        p_drop: float = 0.1,
                        train: bool = False,
                        rng_key=None) -> jnp.ndarray:
    """x: (B, S, H).  pos_embedding: (1, maxlen, H) float32."""
    B, S, H = x.shape
    pe = pos_embedding[0, :S, :].astype(jnp.float32)          # (S, H)
    use_dropout = bool(train) and p_drop > 0.0
    itemsize = jnp.dtype(x.dtype).itemsize

    # Pre-scaled inverted-dropout keep mask (exact nn.Dropout semantics).
    if use_dropout:
        if rng_key is None:
            rng_key = jax.random.PRNGKey(0)
        keep = jax.random.bernoulli(rng_key, 1.0 - p_drop, (B, S, H))
        mask = keep.astype(x.dtype) * jnp.asarray(1.0 / (1.0 - p_drop), x.dtype)
    else:
        mask = None

    if H % 128 == 0:
        # ---- 3D path: tile over the sequence axis, batch folded into the block.
        bytes_per_pos = B * H * itemsize
        tile_s = _BLOCK_BUDGET_BYTES // max(bytes_per_pos, 1)
        tile_s = max(8, (tile_s // 8) * 8)
        if tile_s >= S:
            tile_s = S
        grid = (pl.cdiv(S, tile_s),)
        x_spec = pl.BlockSpec((B, tile_s, H), lambda s: (0, s, 0))
        pe_spec = pl.BlockSpec((tile_s, H), lambda s: (s, 0))
        out_specs = pl.BlockSpec((B, tile_s, H), lambda s: (0, s, 0))
        x_in, pe_in, mask_in = x, pe, mask
        out_shape = jax.ShapeDtypeStruct((B, S, H), x.dtype)
        needs_reshape = False
    else:
        # ---- lane-dense path: flatten (S, H) -> S*H so the minor dim is a
        #      multiple of 128 whenever possible and stores are unmasked.
        C = S * H
        x_in = x.reshape(B, C)
        pe_in = pe.reshape(1, C)
        mask_in = mask.reshape(B, C) if mask is not None else None
        bytes_per_col = B * itemsize
        tile_c = (_BLOCK_BUDGET_BYTES // max(bytes_per_col, 1)) // 128 * 128
        tile_c = max(128, tile_c)
        if tile_c >= C or C % 128 != 0:
            tile_c = C                       # full minor dim is always legal
        grid = (pl.cdiv(C, tile_c),)
        x_spec = pl.BlockSpec((B, tile_c), lambda c: (0, c))
        pe_spec = pl.BlockSpec((1, tile_c), lambda c: (0, c))
        out_specs = pl.BlockSpec((B, tile_c), lambda c: (0, c))
        out_shape = jax.ShapeDtypeStruct((B, C), x.dtype)
        needs_reshape = True

    compiler_params = pltpu.CompilerParams(dimension_semantics=("parallel",))

    if use_dropout:
        in_specs = [x_spec, pe_spec, x_spec]          # mask tiles exactly like x
        grid_spec = pltpu.PrefetchScalarGridSpec(
            num_scalar_prefetch=0, grid=grid,
            in_specs=in_specs, out_specs=out_specs)
        out = pl.pallas_call(_pe_add_dropout_kernel, out_shape=out_shape,
                             grid_spec=grid_spec,
                             compiler_params=compiler_params)(x_in, pe_in, mask_in)
    else:
        in_specs = [x_spec, pe_spec]
        grid_spec = pltpu.PrefetchScalarGridSpec(
            num_scalar_prefetch=0, grid=grid,
            in_specs=in_specs, out_specs=out_specs)
        out = pl.pallas_call(_pe_add_kernel, out_shape=out_shape,
                             grid_spec=grid_spec,
                             compiler_params=compiler_params)(x_in, pe_in)

    if needs_reshape:
        out = out.reshape(B, S, H)
    return out


if __name__ == "__main__":
    B, S, H = 2, 8, 32
    maxlen = 64
    p_drop = 0.1

    key = jax.random.PRNGKey(0)
    x = jax.random.normal(key, (B, S, H), dtype=jnp.float32)

    pos_embedding = make_pos_embedding(H, maxlen)

    # eval-mode forward (dropout == identity), matches PyTorch module.eval()
    out = positional_encoding(x, pos_embedding, p_drop=p_drop, train=False)
    out = jax.block_until_ready(out)

    # plain-JAX reference
    ref = x + pos_embedding[:, :S, :]
    assert out.shape == (B, S, H)
    assert jnp.allclose(out, ref, atol=1e-6), "mismatch vs reference"

    # smoke-test the training/dropout variant (stochastic; check shape, finiteness,
    # and that kept elements equal (x + pe) / (1 - p)).
    out_tr = jax.block_until_ready(
        positional_encoding(x, pos_embedding, p_drop=p_drop, train=True,
                            rng_key=jax.random.PRNGKey(123)))
    assert out_tr.shape == (B, S, H)
    assert bool(jnp.all(jnp.isfinite(out_tr)))
    kept = out_tr != 0.0
    scaled_ref = ref / (1.0 - p_drop)
    assert bool(jnp.all(jnp.where(kept, jnp.abs(out_tr - scaled_ref) < 1e-5, True)))

    print("KERNEL_OK")
</pallas_src>

<mosaic_0001>
module attributes {stable_mosaic.version = 11 : i64} {
  func.func @_pe_add_kernel(%arg0: i32, %arg1: memref<2x256xf32, #tpu.memory_space<vmem>>, %arg2: memref<1x256xf32, #tpu.memory_space<vmem>>, %arg3: memref<2x256xf32, #tpu.memory_space<vmem>>) attributes {dimension_semantics = [#tpu.dimension_semantics<parallel>], iteration_bounds = array<i64: 1>, scalar_prefetch = 0 : i64, scratch_operands = 0 : i64, tpu.core_type = #tpu.core_type<tc>, window_params = [{transform_indices = @transform_0, window_bounds = array<i64: 2, 256>}, {transform_indices = @transform_1, window_bounds = array<i64: 1, 256>}, {transform_indices = @transform_2, window_bounds = array<i64: 2, 256>}]} {
    %c0 = arith.constant 0 : index
    %c0_0 = arith.constant 0 : index
    %0 = vector.load %arg1[%c0, %c0_0] : memref<2x256xf32, #tpu.memory_space<vmem>>, vector<2x256xf32>
    %c0_1 = arith.constant 0 : index
    %c0_2 = arith.constant 0 : index
    %1 = vector.load %arg2[%c0_1, %c0_2] : memref<1x256xf32, #tpu.memory_space<vmem>>, vector<1x256xf32>
    %2 = vector.broadcast %1 : vector<1x256xf32> to vector<2x256xf32>
    %3 = arith.addf %0, %2 : vector<2x256xf32>
    %c0_3 = arith.constant 0 : index
    %c0_4 = arith.constant 0 : index
    %4 = vector.load %arg3[%c0_3, %c0_4] : memref<2x256xf32, #tpu.memory_space<vmem>>, vector<2x256xf32>
    tpu.vector_store %arg3[%c0_3, %c0_4], %3 {strides = array<i32>} : memref<2x256xf32, #tpu.memory_space<vmem>>, vector<2x256xf32>,
    return
  }
  func.func @transform_0(%arg0: i32) -> (i32, i32) {
    %c0_i32 = arith.constant 0 : i32
    %c0_i32_0 = arith.constant 0 : i32
    return %c0_i32, %arg0 : i32, i32
  }
  func.func @transform_1(%arg0: i32) -> (i32, i32) {
    %c0_i32 = arith.constant 0 : i32
    %c0_i32_0 = arith.constant 0 : i32
    return %c0_i32, %arg0 : i32, i32
  }
  func.func @transform_2(%arg0: i32) -> (i32, i32) {
    %c0_i32 = arith.constant 0 : i32
    %c0_i32_0 = arith.constant 0 : i32
    return %c0_i32, %arg0 : i32, i32
  }
}

</mosaic_0001>

<llo_original>
// kernel: tpu_custom_call.1
$region0: #{tpu_custom_call.1}
  #allocation0 [shape = 'u32[]', space=smem, size = 0x4, offset = 0x4, fixed_abs, tag = 'smem constant byte address 0x4 - core index']
  #allocation1 [shape = 'u32[72,128]{1,0:T(1,128)}', space=vmem, size = 0x9000, scoped, tag = 'internal scratch']
  %s0 = inlined_call_operand.hbm [shape: f32[2,256], index: 0, kind: input, shape index: {}]
  %s1 = inlined_call_operand.hbm [shape: f32[1,256], index: 1, kind: input, shape index: {}]
  %s2 = inlined_call_operand.hbm [shape: f32[2,256], index: 2, kind: output, shape index: {}]
  %s3 = sld [smem:[#allocation0]]
  $region26: #{tpu_custom_call.1} parent=0
    _
  %s5 = ssub.s32 1, %s3
  %s6 = scalar_select 0, %s5, %s3
  $region1: #{tpu_custom_call.1} parent=0
    #allocation2 [shape = 'u8[2048]{0}', space=vmem, size = 0x800, scoped, tag = 'input window, operand 0, single buffered']
    #allocation3 [shape = 's32[1]{0}', space=sflag, size = 0x4, scoped, tag = 'scoped memory for tpu_custom_call.1']
    #allocation4 [shape = 's32[1]{0}', space=sflag, size = 0x4, scoped, tag = 'scoped memory for tpu_custom_call.1']
    #allocation5 [shape = 'u8[1024]{0}', space=vmem, size = 0x400, scoped, tag = 'input window, operand 1, single buffered']
    #allocation6 [shape = 's32[1]{0}', space=sflag, size = 0x4, scoped, tag = 'scoped memory for tpu_custom_call.1']
    #allocation7 [shape = 'u8[2048]{0}', space=vmem, size = 0x800, scoped, tag = 'output window, operand 0, single buffered']
    %7 = vsyncpa [#allocation3], 0
    %8 = vsyncpa [#allocation6], 0
    %9 = vsyncpa [#allocation4], 0
    // Predicated region
    $region2: #{tpu_custom_call.1} parent=1 // pred_check
      _
    $region3: #{tpu_custom_call.1} parent=1 // pred_check_branch
      %11 = sbr.rel (0) target = $region5
    $region4: #{tpu_custom_call.1} parent=1 // pred_region
      %13 = vsyncadd [#allocation3], 0
      %s15 = sshll.u32 %s0, 4
      %s16 = int_to_ptr.hbm [resolvable:$true] %s15
      %s17 = sshll.u32 [#allocation2], 4
      %s18 = int_to_ptr.vmem [resolvable:$true] %s17
      %20 = dma.hbm_to_vmem [thread:$0]  %s16, 64, %s18, [#allocation3]
    $region5: #{tpu_custom_call.1} parent=1 // pred_fallthru
      _
    // Predicated region
    $region6: #{tpu_custom_call.1} parent=1 // pred_check
      _
    $region7: #{tpu_custom_call.1} parent=1 // pred_check_branch
      %22 = sbr.rel (0) target = $region9
    $region8: #{tpu_custom_call.1} parent=1 // pred_region
      %24 = vsyncadd [#allocation6], 0
      %s26 = sshll.u32 %s1, 4
      %s27 = int_to_ptr.hbm [resolvable:$true] %s26
      %s28 = sshll.u32 [#allocation5], 4
      %s29 = int_to_ptr.vmem [resolvable:$true] %s28
      %31 = dma.hbm_to_vmem [thread:$0]  %s27, 32, %s29, [#allocation6]
    $region9: #{tpu_custom_call.1} parent=1 // pred_fallthru
      _
    // Predicated region
    $region10: #{tpu_custom_call.1} parent=1 // pred_check
      _
    $region11: #{tpu_custom_call.1} parent=1 // pred_check_branch
      %33 = sbr.rel (0) target = $region13
    $region12: #{tpu_custom_call.1} parent=1 // pred_region
      %35 = dma.done [#allocation3], 64
    $region13: #{tpu_custom_call.1} parent=1 // pred_fallthru
      _
    // Predicated region
    $region14: #{tpu_custom_call.1} parent=1 // pred_check
      _
    $region15: #{tpu_custom_call.1} parent=1 // pred_check_branch
      %37 = sbr.rel (0) target = $region17
    $region16: #{tpu_custom_call.1} parent=1 // pred_region
      %39 = dma.done [#allocation6], 32
    $region17: #{tpu_custom_call.1} parent=1 // pred_fallthru
      _
    %v40 = vld [vmem:[#allocation2] sm:$0xf]
    %v41 = vld [vmem:[#allocation5] sm:$0x3]
    %v43 = vperm.slane %v41, 0
    %v44 = vperm.slane %v41, 1
    %v45 = vrot.slane %v44, 6
    %vm46 = vcmask 1041408
    %v47 = vsel %vm46, %v43, %v45
    %v49 = vadd.f32 %v40, %v47
    %50 = vst [vmem:[#allocation7] sm:$0xf] %v49
    // Predicated region
    $region18: #{tpu_custom_call.1} parent=1 // pred_check
      _
    $region19: #{tpu_custom_call.1} parent=1 // pred_check_branch
      %52 = sbr.rel (0) target = $region21
    $region20: #{tpu_custom_call.1} parent=1 // pred_region
      %54 = vsyncadd [#allocation4], 0
      %s56 = sshll.u32 [#allocation7], 4
      %s57 = int_to_ptr.vmem [resolvable:$true] %s56
      %s58 = sshll.u32 %s2, 4
      %s59 = int_to_ptr.hbm [resolvable:$true] %s58
      %61 = dma.vmem_to_hbm [thread:$0]  %s57, 64, %s59, [#allocation4]
    $region21: #{tpu_custom_call.1} parent=1 // pred_fallthru
      _
    // Predicated region
    $region22: #{tpu_custom_call.1} parent=1 // pred_check
      _
    $region23: #{tpu_custom_call.1} parent=1 // pred_check_branch
      %63 = sbr.rel (0) target = $region25
    $region24: #{tpu_custom_call.1} parent=1 // pred_region
      %65 = dma.done [#allocation4], 64
    $region25: #{tpu_custom_call.1} parent=1 // pred_fallthru
      _
    %66 = vsyncpa [#allocation3], 1
    %67 = vsyncpa [#allocation6], 1
    %68 = vsyncpa [#allocation4], 1

</llo_original>
